<compile_context>
chip_gen: v7x
topology: tpu7x:2x2x1
jax: 0.10.0
libtpu: 0.0.40
codegen_flags: <defaults>
</compile_context>

<pallas_src>
import jax
import jax.numpy as jnp
from jax.experimental import pallas as pl
from jax.experimental.pallas import tpu as pltpu


def _gcal_kernel(w_ref, adj_ref, out_ref):
    # w_ref:   SMEM (C,)       softmax(channel logits), precomputed in the wrapper
    # adj_ref: VMEM (1, N, tn) one channel's column tile of the stacked adjacency
    # out_ref: VMEM (N, tn)    resident accumulator (same block across the C axis)
    c = pl.program_id(1)

    @pl.when(c == 0)
    def _():
        out_ref[...] = jnp.zeros_like(out_ref)

    x = adj_ref[0].astype(jnp.float32)                       # (N, tn)

    # F.normalize(x, dim=1, p=1): per-column L1 norm over rows (axis 0 of this block),
    # fused with the softmaxed channel weight into a single per-column scale.
    col_l1 = jnp.sum(jnp.abs(x), axis=0, keepdims=True)      # (1, tn)
    scale = w_ref[c] * pl.reciprocal(jnp.maximum(col_l1, 1e-12), approx=False)

    out_ref[...] += x * scale                                # channel-weighted accumulate


def _vmem_capacity_bytes():
    try:
        return int(pltpu.get_tpu_info().vmem_capacity_bytes)
    except Exception:
        return 64 * 1024 * 1024  # conservative fallback (v7x-sized VMEM)


def _pick_column_tile(N, capacity_bytes):
    """Largest column tile tn (multiple of 128, or full N) within the VMEM budget."""
    if N % 128 != 0:
        # Small / irregular N: block dims must equal the full array dims.
        # TODO(synk): very large non-128-multiple N would need a masked last tile or a
        #             two-pass (col_l1 then scale) scheme; not needed for typical graphs.
        return N
    # Per column of tn: double-buffered (1, N, tn) f32 input + double-buffered
    # (N, tn) f32 output  ->  ~16 * N bytes per lane.
    budget = min(capacity_bytes * 3 // 4, 96 * 1024 * 1024) - 4 * 1024 * 1024
    tn = (budget // (16 * N)) // 128 * 128
    tn = max(128, min(N, tn))
    # Keep at least 2 column tiles when possible so v7x's two TensorCores both get work.
    if tn == N and N >= 256:
        tn = max(128, (N // 2) // 128 * 128)
    return tn


def graph_channel_att_layer(adj_stack, weight):
    """adj_stack: (C, N, N) float32, weight: (C, 1, 1) float32 -> (N, N) float32."""
    C, N, N2 = adj_stack.shape
    assert N == N2, "adjacency matrices must be square"

    capacity = _vmem_capacity_bytes()
    vmem_limit = min(capacity * 3 // 4, 96 * 1024 * 1024)
    tn = _pick_column_tile(N, capacity)
    grid = (pl.cdiv(N, tn), C)  # (column tiles: parallel, channels: reduction)

    # softmax over channels (dim=0) is only C scalars: do it once in plain JAX.
    w_sm = jax.nn.softmax(weight.reshape(C).astype(jnp.float32), axis=0)  # (C,)

    cost = pl.CostEstimate(
        flops=4 * C * N * N,
        transcendentals=0,
        bytes_accessed=(C + 1) * N * N * 4,
    )

    return pl.pallas_call(
        _gcal_kernel,
        out_shape=jax.ShapeDtypeStruct((N, N), jnp.float32),
        grid_spec=pltpu.PrefetchScalarGridSpec(
            num_scalar_prefetch=0,
            grid=grid,
            in_specs=[
                pl.BlockSpec(memory_space=pltpu.MemorySpace.SMEM),   # w_sm (C,) scalars
                pl.BlockSpec((1, N, tn), lambda j, c: (c, 0, j)),    # per-channel tile
            ],
            out_specs=pl.BlockSpec((N, tn), lambda j, c: (0, j)),    # resident across c
        ),
        compiler_params=pltpu.CompilerParams(
            dimension_semantics=("parallel", "arbitrary"),
            vmem_limit_bytes=vmem_limit,
        ),
        cost_estimate=cost,
    )(w_sm, adj_stack)


if __name__ == "__main__":
    key = jax.random.PRNGKey(0)
    num_channel = 4
    N = 16

    # Deterministic synthetic adjacency matrices (non-negative, like adjacencies).
    keys = jax.random.split(key, num_channel)
    adj_list = [jnp.abs(jax.random.normal(k, (N, N), dtype=jnp.float32)) for k in keys]
    adj_stack = jnp.stack(adj_list)  # (C, N, N), exactly what torch.stack produces

    # nn.init.constant_(self.weight, 0.1), shape (num_channel, 1, 1)
    weight = jnp.full((num_channel, 1, 1), 0.1, dtype=jnp.float32)

    out = graph_channel_att_layer(adj_stack, weight)
    out = jax.block_until_ready(out)

    # Pure-JAX reference check (same math as the PyTorch forward).
    col_l1 = jnp.sum(jnp.abs(adj_stack), axis=1, keepdims=True)
    norm = adj_stack / jnp.maximum(col_l1, 1e-12)
    w_sm_ref = jax.nn.softmax(weight, axis=0)
    ref = jnp.sum(norm * w_sm_ref, axis=0)
    assert jnp.allclose(out, ref, atol=1e-5, rtol=1e-5), "mismatch vs reference"

    print("KERNEL_OK")
</pallas_src>

<mosaic_0001>
module attributes {stable_mosaic.version = 11 : i64} {
  func.func @_gcal_kernel(%arg0: i32, %arg1: i32, %arg2: memref<4xf32, #tpu.memory_space<smem>>, %arg3: memref<1x16x16xf32, #tpu.memory_space<vmem>>, %arg4: memref<16x16xf32, #tpu.memory_space<vmem>>) attributes {dimension_semantics = [#tpu.dimension_semantics<parallel>, #tpu.dimension_semantics<arbitrary>], iteration_bounds = array<i64: 1, 4>, scalar_prefetch = 0 : i64, scratch_operands = 0 : i64, tpu.core_type = #tpu.core_type<tc>, window_params = [{transform_indices = @transform_0, window_bounds = array<i64: 4>}, {transform_indices = @transform_1, window_bounds = array<i64: 1, 16, 16>}, {transform_indices = @transform_2, window_bounds = array<i64: 16, 16>}]} {
    %c0_i32 = arith.constant 0 : i32
    %0 = arith.cmpi eq, %arg1, %c0_i32 : i32
    %1 = arith.extui %0 : i1 to i32
    %c0_i32_0 = arith.constant 0 : i32
    %2 = arith.cmpi ne, %1, %c0_i32_0 : i32
    scf.if %2 {
      %cst_8 = arith.constant 0.000000e+00 : f32
      %20 = vector.broadcast %cst_8 : f32 to vector<16x16xf32>
      %c0_9 = arith.constant 0 : index
      %c0_10 = arith.constant 0 : index
      %21 = vector.load %arg4[%c0_9, %c0_10] : memref<16x16xf32, #tpu.memory_space<vmem>>, vector<16x16xf32>
      tpu.vector_store %arg4[%c0_9, %c0_10], %20 {strides = array<i32>} : memref<16x16xf32, #tpu.memory_space<vmem>>, vector<16x16xf32>,
    } else {
    }
    %c0 = arith.constant 0 : index
    %c0_1 = arith.constant 0 : index
    %c0_2 = arith.constant 0 : index
    %3 = vector.load %arg3[%c0, %c0_1, %c0_2] : memref<1x16x16xf32, #tpu.memory_space<vmem>>, vector<1x16x16xf32>
    %4 = vector.shape_cast %3 : vector<1x16x16xf32> to vector<16x16xf32>
    %5 = math.absf %4 : vector<16x16xf32>
    %cst = arith.constant dense<0.000000e+00> : vector<16xf32>
    %6 = vector.multi_reduction <add>, %5, %cst [0] : vector<16x16xf32> to vector<16xf32>
    %7 = vector.shape_cast %6 : vector<16xf32> to vector<1x16xf32>
    %8 = arith.index_cast %arg1 : i32 to index
    %9 = memref.load %arg2[%8] : memref<4xf32, #tpu.memory_space<smem>>
    %cst_3 = arith.constant 9.99999996E-13 : f32
    %10 = vector.broadcast %cst_3 : f32 to vector<1x16xf32>
    %11 = arith.maximumf %7, %10 : vector<1x16xf32>
    %12 = tpu.reciprocal %11 : vector<1x16xf32> -> vector<1x16xf32>
    %13 = vector.broadcast %9 : f32 to vector<1x16xf32>
    %14 = arith.mulf %13, %12 : vector<1x16xf32>
    %c0_4 = arith.constant 0 : index
    %c0_5 = arith.constant 0 : index
    %15 = vector.load %arg4[%c0_4, %c0_5] : memref<16x16xf32, #tpu.memory_space<vmem>>, vector<16x16xf32>
    %16 = vector.broadcast %14 : vector<1x16xf32> to vector<16x16xf32>
    %17 = arith.mulf %4, %16 : vector<16x16xf32>
    %18 = arith.addf %15, %17 : vector<16x16xf32>
    %c0_6 = arith.constant 0 : index
    %c0_7 = arith.constant 0 : index
    %19 = vector.load %arg4[%c0_6, %c0_7] : memref<16x16xf32, #tpu.memory_space<vmem>>, vector<16x16xf32>
    tpu.vector_store %arg4[%c0_6, %c0_7], %18 {strides = array<i32>} : memref<16x16xf32, #tpu.memory_space<vmem>>, vector<16x16xf32>,
    return
  }
  func.func @transform_0(%arg0: i32, %arg1: i32) -> i32 {
    %c0_i32 = arith.constant 0 : i32
    %c0_i32_0 = arith.constant 0 : i32
    return %c0_i32 : i32
  }
  func.func @transform_1(%arg0: i32, %arg1: i32) -> (i32, i32, i32) {
    %c0_i32 = arith.constant 0 : i32
    %c0_i32_0 = arith.constant 0 : i32
    return %arg1, %c0_i32, %arg0 : i32, i32, i32
  }
  func.func @transform_2(%arg0: i32, %arg1: i32) -> (i32, i32) {
    %c0_i32 = arith.constant 0 : i32
    %c0_i32_0 = arith.constant 0 : i32
    return %c0_i32, %arg0 : i32, i32
  }
}

</mosaic_0001>

<llo_original>
// kernel: tpu_custom_call.1
$region0: #{tpu_custom_call.1}
  #allocation0 [shape = 'u32[]', space=smem, size = 0x4, offset = 0x4, fixed_abs, tag = 'smem constant byte address 0x4 - core index']
  #allocation1 [shape = 'u32[144,128]{1,0:T(1,128)}', space=vmem, size = 0x12000, scoped, tag = 'internal scratch']
  %s0 = inlined_call_operand.hbm [shape: f32[4], index: 0, kind: input, shape index: {}]
  %s1 = inlined_call_operand.hbm [shape: f32[4,16,16], index: 1, kind: input, shape index: {}]
  %s2 = inlined_call_operand.hbm [shape: f32[16,16], index: 2, kind: output, shape index: {}]
  %s3 = sld [smem:[#allocation0]]
  $region53: #{tpu_custom_call.1} parent=0
    _
  %s5 = ssub.s32 1, %s3
  %s6 = scalar_select 0, %s5, %s3
  $region1: #{tpu_custom_call.1} parent=0
    #allocation2 [shape = 'u8[512]{0}', space=smem, size = 0x200, scoped, tag = 'input window, operand 0, single buffered']
    #allocation3 [shape = 's32[2]{0}', space=sflag, size = 0x8, scoped, tag = 'scoped memory for tpu_custom_call.1']
    #allocation4 [shape = 's32[2]{0}', space=sflag, size = 0x8, scoped, tag = 'scoped memory for tpu_custom_call.1']
    #allocation5 [shape = 's32[2]{0}', space=sflag, size = 0x8, scoped, tag = 'scoped memory for tpu_custom_call.1']
    #allocation6 [shape = 'u8[16384]{0}', space=vmem, size = 0x4000, scoped, tag = 'input window, operand 1']
    #allocation7 [shape = 'u8[8192]{0}', space=vmem, size = 0x2000, scoped, tag = 'output window, operand 0, single buffered']
    %7 = vsyncpa [#allocation5], 0
    %8 = vsyncpa [#allocation3], 0
    %s9 = scalar_lea.sflag [#allocation3], 1
    %10 = vsyncpa %s9, 0
    %11 = vsyncpa [#allocation4], 0
    loop: start=0, step=1, limit=6
    $region2: #{tpu_custom_call.1} parent=1 // loop_pre_header
      _
    $region3: #{tpu_custom_call.1} parent=1 // loop_header
      %s13 = sphi 0, %s17
      %p14 = scmp.ge.s32.totalorder %s13, 6
      %s20 = sphi 0, %s32
      %s21 = sphi 0, %s28
      %s22 = sphi 0, %s20
      %s23 = sphi 0, %s21
      %s24 = sphi 0, %s22
      %s25 = sphi 0, %s23
      %s33 = sphi 0, %s33
      %s35 = sphi 0, %s33
      %s36 = sphi 0, %s35
      %s50 = sphi 0, %s36
      %s58 = sphi 0, %s60
      %s61 = sphi 0, %s58
      %s62 = sphi 0, %s61
      %s78 = sphi 0, %s62
      %s84 = sphi 0, %s86
      %s87 = sphi 0, %s84
      %s88 = sphi 0, %s87
      %s104 = sphi 0, %s88
    $region4: #{tpu_custom_call.1} parent=1 // loop_header_branch
      %16 = sbr.rel (%p14) target = $region8
    $region5: #{tpu_custom_call.1} parent=1 // loop_body
      %s18 = ssub.s32 %s13, 1
      %s19 = ssub.s32 %s13, 2
      %s26 = sadd.s32 1, %s21
      %p27 = scmp.ge.s32.totalorder %s26, 4
      %s28 = scalar_select %p27, 0, %s26
      %s29 = sadd.s32 1, %s20
      %s30 = scalar_select %p27, %s29, %s20
      %p31 = scmp.ge.s32.totalorder %s30, 1
      %s32 = scalar_select %p31, 0, %s30
      %s34 = sadd.s32 %s33, 1
      %p37 = scmp.eq.s32.totalorder %s13, 3
      %p38 = scmp.ne.s32.totalorder %s33, %s35
      %p39 = scmp.eq.s32.totalorder %s13, 0
      %p40 = por %p38, %p39
      %p41 = scmp.ne.s32.totalorder %s33, %s35
      %p42 = scmp.eq.s32.totalorder %s18, 3
      %p43 = por %p41, %p42
      %p44 = scmp.ne.s32.totalorder %s35, %s36
      %p45 = scmp.eq.s32.totalorder %s18, 0
      %p46 = por %p44, %p45
      %p47 = scmp.ne.s32.totalorder %s35, %s36
      %p48 = scmp.eq.s32.totalorder %s19, 3
      %p49 = por %p47, %p48
      %p51 = scmp.ne.s32.totalorder %s36, %s50
      %p52 = scmp.eq.s32.totalorder %s19, 0
      %p53 = por %p51, %p52
      %s54 = ssub.s32 %s21, %s28
      %s55 = ssub.s32 %s20, %s32
      %s56 = sor.u32 %s54, %s55
      %p57 = scmp.eq.s32.totalorder %s56, 0
      %s59 = sadd.s32 %s58, 1
      %s60 = scalar_select %p57, %s58, %s59
      %p63 = pneg %p57
      %p64 = scmp.eq.s32.totalorder %s13, 3
      %p65 = por %p63, %p64
      %p66 = scmp.ne.s32.totalorder %s58, %s61
      %p67 = scmp.eq.s32.totalorder %s13, 0
      %p68 = por %p66, %p67
      %p69 = scmp.ne.s32.totalorder %s58, %s61
      %p70 = scmp.eq.s32.totalorder %s18, 3
      %p71 = por %p69, %p70
      %p72 = scmp.ne.s32.totalorder %s61, %s62
      %p73 = scmp.eq.s32.totalorder %s18, 0
      %p74 = por %p72, %p73
      %p75 = scmp.ne.s32.totalorder %s61, %s62
      %p76 = scmp.eq.s32.totalorder %s19, 3
      %p77 = por %p75, %p76
      %p79 = scmp.ne.s32.totalorder %s62, %s78
      %p80 = scmp.eq.s32.totalorder %s19, 0
      %p81 = por %p79, %p80
      %s82 = ssub.s32 %s20, %s32
      %p83 = scmp.eq.s32.totalorder %s82, 0
      %s85 = sadd.s32 %s84, 1
      %s86 = scalar_select %p83, %s84, %s85
      %p89 = pneg %p83
      %p90 = scmp.eq.s32.totalorder %s13, 3
      %p91 = por %p89, %p90
      %p92 = scmp.ne.s32.totalorder %s84, %s87
      %p93 = scmp.eq.s32.totalorder %s13, 0
      %p94 = por %p92, %p93
      %p95 = scmp.ne.s32.totalorder %s84, %s87
      %p96 = scmp.eq.s32.totalorder %s18, 3
      %p97 = por %p95, %p96
      %p98 = scmp.ne.s32.totalorder %s87, %s88
      %p99 = scmp.eq.s32.totalorder %s18, 0
      %p100 = por %p98, %p99
      %p101 = scmp.ne.s32.totalorder %s87, %s88
      %p102 = scmp.eq.s32.totalorder %s19, 3
      %p103 = por %p101, %p102
      %p105 = scmp.ne.s32.totalorder %s88, %s104
      %p106 = scmp.eq.s32.totalorder %s19, 0
      %p107 = por %p105, %p106
      %p108 = scmp.le.s32.totalorder 1, %s13
      %p109 = scmp.lt.s32.totalorder %s13, 5
      %p110 = pnand %p108, %p109
      %p111 = pneg %p110
      // Predicated region
      $region9: #{tpu_custom_call.1} parent=5 // pred_check
        _
      $region10: #{tpu_custom_call.1} parent=5 // pred_check_branch
        %113 = sbr.rel (%p110) target = $region12
      $region11: #{tpu_custom_call.1} parent=5 // pred_region
        %s114 = ssub.s32 %s13, 1
        // Predicated region
        $region13: #{tpu_custom_call.1} parent=11 // pred_check
          %p115 = pneg %p46
        $region14: #{tpu_custom_call.1} parent=11 // pred_check_branch
          %117 = sbr.rel (%p115) target = $region16
        $region15: #{tpu_custom_call.1} parent=11 // pred_region
          %s119 = ssub.s32 16, 16
          %120 = vsyncadd [#allocation5], %s119
          %123 = dma.hbm_to_smem %s0, 16, [#allocation2], [#allocation5]
        $region16: #{tpu_custom_call.1} parent=11 // pred_fallthru
          _
      $region12: #{tpu_custom_call.1} parent=5 // pred_fallthru
        _
      %p124 = scmp.lt.s32.totalorder %s13, 4
      // Predicated region
      $region17: #{tpu_custom_call.1} parent=5 // pred_check
        %p125 = pneg %p124
      $region18: #{tpu_custom_call.1} parent=5 // pred_check_branch
        %127 = sbr.rel (%p125) target = $region20
      $region19: #{tpu_custom_call.1} parent=5 // pred_region
        // Predicated region
        $region21: #{tpu_custom_call.1} parent=19 // pred_check
          %p128 = pneg %p68
        $region22: #{tpu_custom_call.1} parent=19 // pred_check_branch
          %130 = sbr.rel (%p128) target = $region24
        $region23: #{tpu_custom_call.1} parent=19 // pred_region
          %s131 = sand.u32 %s58, 1
          %s132 = scalar_lea.sflag [#allocation3], %s131
          %s133 = sand.u32 %s58, 1
          %s134 = smul.addr %s133, 16
          %s135 = scalar_lea.vmem [#allocation6], %s134
          %s137 = ssub.s32 256, 256
          %138 = vsyncadd %s132, %s137
          %s139 = smul.addr %s21, 2
          %s140 = sadd.s32 %s20, %s139
          %s141 = smul.addr %s140, 128
          %s142 = scalar_lea.hbm %s1, %s141
          %s143 = sshll.u32 %s135, 4
          %s144 = int_to_ptr.vmem [resolvable:$true] %s143
          %149 = dma.hbm_to_vmem [thread:$0]  %s142, 256, %s144, %s132, 128, 128, 8
        $region24: #{tpu_custom_call.1} parent=19 // pred_fallthru
          _
      $region20: #{tpu_custom_call.1} parent=5 // pred_fallthru
        _
      %p150 = scmp.le.s32.totalorder 1, %s13
      %p151 = scmp.lt.s32.totalorder %s13, 5
      %p152 = pnand %p150, %p151
      %p153 = pneg %p152
      // Predicated region
      $region25: #{tpu_custom_call.1} parent=5 // pred_check
        _
      $region26: #{tpu_custom_call.1} parent=5 // pred_check_branch
        %155 = sbr.rel (%p152) target = $region28
      $region27: #{tpu_custom_call.1} parent=5 // pred_region
        %s156 = ssub.s32 %s13, 1
        // Predicated region
        $region29: #{tpu_custom_call.1} parent=27 // pred_check
          %p157 = pneg %p46
        $region30: #{tpu_custom_call.1} parent=27 // pred_check_branch
          %159 = sbr.rel (%p157) target = $region32
        $region31: #{tpu_custom_call.1} parent=27 // pred_region
          %160 = dma.done [#allocation5], 16
        $region32: #{tpu_custom_call.1} parent=27 // pred_fallthru
          _
        %s161 = sand.u32 %s61, 1
        %s162 = scalar_lea.sflag [#allocation3], %s161
        %s163 = sand.u32 %s61, 1
        %s164 = smul.addr %s163, 16
        %s165 = scalar_lea.vmem [#allocation6], %s164
        // Predicated region
        $region33: #{tpu_custom_call.1} parent=27 // pred_check
          %p166 = pneg %p74
        $region34: #{tpu_custom_call.1} parent=27 // pred_check_branch
          %168 = sbr.rel (%p166) target = $region36
        $region35: #{tpu_custom_call.1} parent=27 // pred_region
          %169 = dma.done %s162, 256
        $region36: #{tpu_custom_call.1} parent=27 // pred_fallthru
          _
        %170 = sfence
        %p171 = pneg %p46
        %p172 = pneg %p43
        %s173 = sand.u32 %s61, 1
        %s174 = scalar_lea.sflag [#allocation3], %s173
        %s175 = sand.u32 %s61, 1
        %s176 = smul.addr %s175, 16
        %s177 = scalar_lea.vmem [#allocation6], %s176
        %p178 = pneg %p74
        %p179 = pneg %p71
        %p180 = pneg %p100
        %p181 = pneg %p97
        %p182 = scmp.eq.s32.totalorder %s23, 0
        // Predicated region
        $region37: #{tpu_custom_call.1} parent=27 // pred_check
          %p183 = pneg %p182
        $region38: #{tpu_custom_call.1} parent=27 // pred_check_branch
          %185 = sbr.rel (%p183) target = $region40
        $region39: #{tpu_custom_call.1} parent=27 // pred_region
          %vm186 = vcmask 130048
          %187 = vst.msk [vmem:[#allocation7] sm:$0xff] %vm186, 0.0
          %188 = vst.msk [vmem:[#allocation7 + $0x8] sm:$0xff] %vm186, 0.0
        $region40: #{tpu_custom_call.1} parent=27 // pred_fallthru
          _
        %v189 = vld [vmem:[%s165] sm:$0xff]
        %v190 = vld [vmem:[%s165 + $0x8] sm:$0xff]
        %v191 = vand.u32 2147483647, %v189
        %v192 = vand.u32 2147483647, %v190
        %vm193 = vcmask 130048
        %v194 = vsel %vm193, %v191, 0.0
        %v195 = vsel %vm193, %v192, 0.0
        %v196 = vadd.f32 %v194, %v195
        %v197 = vrot.slane %v196, 4
        %v198 = vadd.f32 %v196, %v197
        %v199 = vrot.slane %v198, 2
        %v200 = vadd.f32 %v198, %v199
        %v201 = vrot.slane %v200, 1
        %v202 = vadd.f32 %v200, %v201
        %s203 = sld [smem:[#allocation2 + %s23]]
        %v204 = vmax.f32 %v202, 1e-12
        %v205 = vrcp.pop %v204
        %v206 = vstv %s203
        %v207 = vmul.f32 %v206, %v205
        %v208 = vld [vmem:[#allocation7] sm:$0xff]
        %v209 = vld [vmem:[#allocation7 + $0x8] sm:$0xff]
        %v210 = vmul.f32 %v189, %v207
        %v211 = vmul.f32 %v190, %v207
        %v212 = vadd.f32 %v208, %v210
        %v213 = vadd.f32 %v209, %v211
        %214 = vst.msk [vmem:[#allocation7] sm:$0xff] %vm193, %v212
        %215 = vst.msk [vmem:[#allocation7 + $0x8] sm:$0xff] %vm193, %v213
        // Predicated region
        $region41: #{tpu_custom_call.1} parent=27 // pred_check
          %p216 = pneg %p97
        $region42: #{tpu_custom_call.1} parent=27 // pred_check_branch
          %218 = sbr.rel (%p216) target = $region44
        $region43: #{tpu_custom_call.1} parent=27 // pred_region
          %s220 = ssub.s32 256, 256
          %221 = vsyncadd [#allocation4], %s220
          %s222 = smul.addr %s22, 128
          %s223 = scalar_lea.hbm %s2, %s222
          %s224 = sshll.u32 [#allocation7], 4
          %s225 = int_to_ptr.vmem [resolvable:$true] %s224
          %230 = dma.vmem_to_hbm [thread:$0]  %s225, 256, %s223, [#allocation4], 128, 128, 8
        $region44: #{tpu_custom_call.1} parent=27 // pred_fallthru
          _
        // Predicated region
        $region45: #{tpu_custom_call.1} parent=27 // pred_check
          %p231 = pneg %p97
        $region46: #{tpu_custom_call.1} parent=27 // pred_check_branch
          %233 = sbr.rel (%p231) target = $region48
        $region47: #{tpu_custom_call.1} parent=27 // pred_region
          %234 = dma.done [#allocation4], 256
        $region48: #{tpu_custom_call.1} parent=27 // pred_fallthru
          _
      $region28: #{tpu_custom_call.1} parent=5 // pred_fallthru
        _
      %p235 = scmp.le.s32.totalorder 2, %s13
      // Predicated region
      $region49: #{tpu_custom_call.1} parent=5 // pred_check
        %p236 = pneg %p235
      $region50: #{tpu_custom_call.1} parent=5 // pred_check_branch
        %238 = sbr.rel (%p236) target = $region52
      $region51: #{tpu_custom_call.1} parent=5 // pred_region
        %s239 = ssub.s32 %s13, 2
      $region52: #{tpu_custom_call.1} parent=5 // pred_fallthru
        _
    $region6: #{tpu_custom_call.1} parent=1 // loop_footer
      %s17 = sadd.s32 1, %s13
    $region7: #{tpu_custom_call.1} parent=1 // loop_footer_branch
      %12 = sbr.rel target = $region3
    $region8: #{tpu_custom_call.1} parent=1 // loop_exit
      _
    %240 = vsyncpa [#allocation3], 1
    %s241 = scalar_lea.sflag [#allocation3], 1
    %242 = vsyncpa %s241, 1
    %243 = vsyncpa [#allocation4], 1
    %s244 = scalar_lea.sflag [#allocation4], 1
    %245 = vsyncpa %s244, 1
    %246 = vsyncpa [#allocation5], 1
    %s247 = scalar_lea.sflag [#allocation5], 1
    %248 = vsyncpa %s247, 1

</llo_original>
